<compile_context>
chip_gen: v5e
topology: v5e:2x2
jax: 0.10.0
libtpu: 0.0.40
codegen_flags: <defaults>
</compile_context>

<pallas_src>
import math
import jax
import jax.numpy as jnp
from jax.experimental import pallas as pl
from jax.experimental.pallas import tpu as pltpu


_NEG_BIG = -1e30      # finite "-inf" for padded vocab lanes (keeps exp/max NaN-free)
_OUT_LANES = 128      # lane-dense output width -> unmasked stores


def _round_up(x, m):
    return (x + m - 1) // m * m


def _device_info():
    try:
        vmem_bytes = pltpu.get_tpu_info().vmem_capacity_bytes
    except Exception:
        vmem_bytes = 64 * 1024 * 1024
    kind = ""
    try:
        kind = jax.devices()[0].device_kind.lower()
    except Exception:
        pass
    return vmem_bytes, kind


def _vmem_bytes_needed(tm, tn, h):
    """K(=H)-aware VMEM footprint of one pipelined step (double-buffered)."""
    return (2 * 2 * tm * h * 2        # policy + base hidden tiles, bf16, 2 buffers each
            + 2 * 2 * h * tn * 2      # new + base lm_head weight tiles, bf16, 2 buffers
            + 2 * tn * 4              # summed bias
            + 2 * tm * 128 * 4        # labels (i32, lane-padded to 128)
            + 2 * tm * 128 * 4        # lane-dense f32 output
            + 3 * tm * 128 * 4)       # m / l / selected scratch (lane-padded)


def _tile_plan(h, v, *, tm=None, tn=None):
    """Generation-aware defaults, then shrink TN (free) / TM until VMEM budget fits."""
    vmem_bytes, kind = _device_info()
    vmem_limit = int(min(vmem_bytes - 8 * 1024 * 1024, 100 * 1024 * 1024))
    budget = int(0.9 * vmem_limit)

    tm_user, tn_user = tm, tn
    if tm is None:
        if vmem_bytes >= 100 * 1024 * 1024:        # v5e / v6e class (128 MiB VMEM)
            is_v5e = ("v5e" in kind) or ("v5 lite" in kind) or ("v5lite" in kind)
            tm_d = 256 if is_v5e else 1024         # v5e roofline ~240 fl/B; v6e ~700 fl/B
        else:                                      # v7x class (64 MiB VMEM / TensorCore)
            tm_d = 512                             # ~310 fl/B roofline + DMA-jitter slack
    else:
        tm_d = tm
    tn_d = 1024 if tn is None else tn

    # Alignment: 2x256^2 MXU on v6e/v7x -> prefer 256 multiples; bf16 sublane packing
    # wants tm % 16 == 0; lanes want tn % 128 == 0.
    tm_d = max(16, _round_up(tm_d, 256) if tm_d >= 256 else _round_up(tm_d, 16))
    tn_d = max(128, _round_up(tn_d, 256) if tn_d >= 256 else _round_up(tn_d, 128))
    tn_d = min(tn_d, _round_up(v, 128))

    def fits():
        return _vmem_bytes_needed(tm_d, tn_d, h) <= budget

    # Shrink TN first (weight HBM traffic is TN-independent), then TM, only for
    # values that were not explicitly requested by the caller.
    if tn_user is None:
        while not fits() and tn_d > 256:
            tn_d //= 2
    if tm_user is None:
        while not fits() and tm_d > 256:
            tm_d //= 2
    if tn_user is None:
        while not fits() and tn_d > 128:
            tn_d //= 2
    if tm_user is None:
        while not fits() and tm_d > 16:
            tm_d //= 2
    return tm_d, tn_d, vmem_limit


# ---------------------------------------------------------------------------
# Pallas kernel: dual-lm_head matmul + online log-softmax + label gather
# ---------------------------------------------------------------------------

def _actor_logprob_kernel(hp_ref, hb_ref, wn_ref, wb_ref, b_ref, lab_ref,
                          out_ref, m_scr, l_scr, sel_scr):
    j = pl.program_id(1)
    n_vocab_blocks = pl.num_programs(1)
    tn = wn_ref.shape[1]

    @pl.when(j == 0)
    def _init():
        m_scr[...] = jnp.full(m_scr.shape, -jnp.inf, m_scr.dtype)
        l_scr[...] = jnp.zeros(l_scr.shape, l_scr.dtype)
        sel_scr[...] = jnp.zeros(sel_scr.shape, sel_scr.dtype)

    # Two MXU contractions (policy head + base head), f32 accumulation, then bias.
    logits = jnp.dot(hp_ref[...], wn_ref[...], preferred_element_type=jnp.float32)
    logits = logits + jnp.dot(hb_ref[...], wb_ref[...], preferred_element_type=jnp.float32)
    logits = logits + b_ref[...]                                    # [TM, TN] f32

    # Gather combined logits at the labels: single iota vs tile-relative label index.
    rel = lab_ref[...] - j * tn                                     # [TM, 1] i32
    col = jax.lax.broadcasted_iota(jnp.int32, logits.shape, 1)
    hit = col == rel
    sel_scr[...] += jnp.sum(jnp.where(hit, logits, 0.0), axis=-1, keepdims=True)

    # Online (flash-style) log-sum-exp across vocab tiles.
    m_old = m_scr[...]
    m_new = jnp.maximum(m_old, jnp.max(logits, axis=-1, keepdims=True))
    l_scr[...] = l_scr[...] * jnp.exp(m_old - m_new) + jnp.sum(
        jnp.exp(logits - m_new), axis=-1, keepdims=True)
    m_scr[...] = m_new

    @pl.when(j == n_vocab_blocks - 1)
    def _finalize():
        logp = sel_scr[...] - (m_scr[...] + jnp.log(l_scr[...]))    # [TM, 1]
        # Lane-dense (TM, 128) store; wrapper reads column 0.
        out_ref[...] = jnp.broadcast_to(logp, out_ref.shape)


# ---------------------------------------------------------------------------
# Wrappers
# ---------------------------------------------------------------------------

def prepare_fused_head(w_new, b_new, w_base, b_base, *, tm=None, tn=None):
    """One-time preparation of the modulated lm_head (no per-call weight reshuffling).

    w_*: [H, V] f32, b_*: [1, V] f32.  Pads V to a TN multiple, casts weights to bf16 and
    sums the biases once, so the per-call wrapper never touches the (H, V) weights again.
    """
    H, V = w_new.shape
    tm_p, tn_p, vmem_limit = _tile_plan(H, V, tm=tm, tn=tn)
    v_pad = _round_up(V, tn_p)

    wn = jnp.pad(w_new.astype(jnp.bfloat16), ((0, 0), (0, v_pad - V)))
    wb = jnp.pad(w_base.astype(jnp.bfloat16), ((0, 0), (0, v_pad - V)))
    # Padded vocab lanes get a large negative bias so they vanish from max/exp and never
    # match a (valid, < V) label.
    b_sum = jnp.pad((b_new + b_base).astype(jnp.float32), ((0, 0), (0, v_pad - V)),
                    constant_values=_NEG_BIG)
    return dict(wn=wn, wb=wb, b=b_sum, hidden=H, vocab=V,
                tm=tm_p, tn=tn_p, vmem_limit=vmem_limit)


def fused_modulated_logprobs(hidden_policy, hidden_base, labels, head):
    """log_softmax(h_p @ Wn + b_n + h_b @ Wb + b_b) gathered at `labels`.

    hidden_*: [N, H] f32, labels: [N] or [N, 1] i32 (values in [0, V)), head from
    prepare_fused_head -> [N] f32.
    """
    N, H = hidden_policy.shape
    assert H == head["hidden"]
    tn = head["tn"]
    vmem_limit = head["vmem_limit"]
    v_pad = head["wn"].shape[1]

    # Clamp the row tile to the problem size (keep 16-alignment for bf16 sublane packing).
    tm = max(16, min(head["tm"], _round_up(N, 16)))
    n_pad = _round_up(N, tm)
    grid = (n_pad // tm, v_pad // tn)

    hp = jnp.pad(hidden_policy.astype(jnp.bfloat16), ((0, n_pad - N), (0, 0)))
    hb = jnp.pad(hidden_base.astype(jnp.bfloat16), ((0, n_pad - N), (0, 0)))
    lab = jnp.pad(labels.astype(jnp.int32).reshape(N, 1), ((0, n_pad - N), (0, 0)))

    cost = pl.CostEstimate(
        flops=2 * n_pad * (2 * H) * v_pad,
        transcendentals=n_pad * v_pad,
        bytes_accessed=(grid[0] * 2 * H * v_pad * 2   # both lm_heads re-streamed / row block
                        + grid[0] * v_pad * 4         # bias re-streamed / row block
                        + n_pad * H * 2 * 2           # both hidden streams (bf16), once
                        + n_pad * 4                   # labels
                        + n_pad * _OUT_LANES * 4),    # lane-dense output
    )

    out = pl.pallas_call(
        _actor_logprob_kernel,
        out_shape=jax.ShapeDtypeStruct((n_pad, _OUT_LANES), jnp.float32),
        grid_spec=pltpu.PrefetchScalarGridSpec(
            num_scalar_prefetch=0,
            grid=grid,
            in_specs=[
                pl.BlockSpec((tm, H), lambda i, j: (i, 0)),      # policy hidden rows
                pl.BlockSpec((tm, H), lambda i, j: (i, 0)),      # base hidden rows
                pl.BlockSpec((H, tn), lambda i, j: (0, j)),      # new lm_head weights
                pl.BlockSpec((H, tn), lambda i, j: (0, j)),      # base lm_head weights
                pl.BlockSpec((1, tn), lambda i, j: (0, j)),      # summed bias
                pl.BlockSpec((tm, 1), lambda i, j: (i, 0)),      # labels
            ],
            out_specs=pl.BlockSpec((tm, _OUT_LANES), lambda i, j: (i, 0)),
            scratch_shapes=[pltpu.VMEM((tm, 1), jnp.float32)] * 3,   # m, l, selected
        ),
        compiler_params=pltpu.CompilerParams(
            dimension_semantics=("parallel", "arbitrary"),
            vmem_limit_bytes=vmem_limit,
        ),
        cost_estimate=cost,
    )(hp, hb, head["wn"], head["wb"], head["b"], lab)

    return out[:N, 0]


# ---------------------------------------------------------------------------
# Plain-JAX glue reproducing the surrounding ActorCustom.forward semantics.
# ---------------------------------------------------------------------------

def get_position_ids(attention_mask):
    # position_ids = attention_mask.long().cumsum(-1) - 1 ; masked_fill_(mask==0, 1)
    pos = jnp.cumsum(attention_mask.astype(jnp.int32), axis=-1) - 1
    return jnp.where(attention_mask == 0, 1, pos)


def synthetic_backbone(sequences, position_ids, tok_emb, pos_emb, proj):
    # TODO(synk): stands in for the pretrained transformer backbone (no checkpoint available).
    h = tok_emb[sequences] + pos_emb[position_ids]
    return jnp.tanh(h @ proj)


def make_params(key, vocab, hidden, additional_sd_divider=1.0):
    ks = jax.random.split(key, 8)
    # policy backbone
    tok_p = jax.random.normal(ks[0], (vocab, hidden), jnp.float32) * 0.02
    pos_p = jax.random.normal(ks[1], (1024, hidden), jnp.float32) * 0.02
    prj_p = jax.random.normal(ks[2], (hidden, hidden), jnp.float32) * (1.0 / math.sqrt(hidden))
    # base (initial_model) backbone
    tok_b = jax.random.normal(ks[3], (vocab, hidden), jnp.float32) * 0.02
    pos_b = jax.random.normal(ks[4], (1024, hidden), jnp.float32) * 0.02
    prj_b = jax.random.normal(ks[5], (hidden, hidden), jnp.float32) * (1.0 / math.sqrt(hidden))
    # new lm_head: nn.Linear(H, V), xavier_normal_ weight then /= additional_sd_divider, zero bias
    xavier_std = math.sqrt(2.0 / (hidden + vocab))
    w_new = jax.random.normal(ks[6], (hidden, vocab), jnp.float32) * xavier_std / additional_sd_divider
    b_new = jnp.zeros((1, vocab), jnp.float32)
    # base model's original lm_head
    w_base = jax.random.normal(ks[7], (hidden, vocab), jnp.float32) * 0.02
    b_base = jnp.zeros((1, vocab), jnp.float32)
    return dict(tok_p=tok_p, pos_p=pos_p, prj_p=prj_p,
                tok_b=tok_b, pos_b=pos_b, prj_b=prj_b,
                w_new=w_new, b_new=b_new, w_base=w_base, b_base=b_base)


def actor_custom_forward(params, head, sequences, num_actions, attention_mask):
    """Equivalent of ActorCustom.forward(sequences, num_actions, attention_mask) default path."""
    B, T = sequences.shape
    H = params["prj_p"].shape[0]
    position_ids = get_position_ids(attention_mask)

    hid_policy = synthetic_backbone(sequences, position_ids,
                                    params["tok_p"], params["pos_p"], params["prj_p"])
    hid_base = synthetic_backbone(sequences, position_ids,
                                  params["tok_b"], params["pos_b"], params["prj_b"])

    # logits[:, :-1, :] corresponds to hidden[:, :-1, :]; labels = sequences[:, 1:]
    hp = hid_policy[:, :-1, :].reshape(B * (T - 1), H)
    hb = hid_base[:, :-1, :].reshape(B * (T - 1), H)
    labels = sequences[:, 1:].reshape(B * (T - 1)).astype(jnp.int32)

    lp = fused_modulated_logprobs(hp, hb, labels, head)
    log_probs = lp.reshape(B, T - 1)
    return log_probs[:, -num_actions:]


def _reference_forward(params, sequences, num_actions, attention_mask):
    B, T = sequences.shape
    position_ids = get_position_ids(attention_mask)
    hp = synthetic_backbone(sequences, position_ids, params["tok_p"], params["pos_p"], params["prj_p"])
    hb = synthetic_backbone(sequences, position_ids, params["tok_b"], params["pos_b"], params["prj_b"])
    # Match the kernel's bf16 streaming of hidden states / lm_head weights (f32 accumulation).
    hp = hp.astype(jnp.bfloat16).astype(jnp.float32)
    hb = hb.astype(jnp.bfloat16).astype(jnp.float32)
    wn = params["w_new"].astype(jnp.bfloat16).astype(jnp.float32)
    wb = params["w_base"].astype(jnp.bfloat16).astype(jnp.float32)
    hi = jax.lax.Precision.HIGHEST
    combined = (jnp.matmul(hp, wn, precision=hi) + params["b_new"]
                + jnp.matmul(hb, wb, precision=hi) + params["b_base"])
    combined = combined[:, :-1, :]
    labels = sequences[:, 1:].astype(jnp.int32)
    logp = jax.nn.log_softmax(combined, axis=-1)
    lp = jnp.take_along_axis(logp, labels[..., None], axis=-1)[..., 0]
    return lp[:, -num_actions:]


if __name__ == "__main__":
    # Small shapes; tm=16 / tn=128 forces a (2 row-block x 4 vocab-block) grid so the
    # online LSE rescale, the vocab-tile label offset, and row padding are all exercised.
    B, T, H, V = 4, 9, 32, 512
    num_actions = 4

    key = jax.random.PRNGKey(0)
    k_param, k_seq = jax.random.split(key)
    params = make_params(k_param, V, H, additional_sd_divider=2.0)

    # One-time lm_head preparation (padded bf16 weights + summed bias + tile plan).
    head = prepare_fused_head(params["w_new"], params["b_new"],
                              params["w_base"], params["b_base"], tm=16, tn=128)

    sequences = jax.random.randint(k_seq, (B, T), 0, V, dtype=jnp.int32)
    attention_mask = jnp.ones((B, T), jnp.int32).at[1, 0].set(0)  # one left-padded example

    out = actor_custom_forward(params, head, sequences, num_actions, attention_mask)
    out = jax.block_until_ready(out)

    ref = _reference_forward(params, sequences, num_actions, attention_mask)
    assert out.shape == (B, num_actions)
    assert jnp.allclose(out, ref, atol=5e-3, rtol=5e-3), (out, ref)
    print("KERNEL_OK")
</pallas_src>

<mosaic_0001>
module attributes {stable_mosaic.version = 11 : i64} {
  func.func @_actor_logprob_kernel(%arg0: i32, %arg1: i32, %arg2: memref<16x32xbf16, #tpu.memory_space<vmem>>, %arg3: memref<16x32xbf16, #tpu.memory_space<vmem>>, %arg4: memref<32x128xbf16, #tpu.memory_space<vmem>>, %arg5: memref<32x128xbf16, #tpu.memory_space<vmem>>, %arg6: memref<1x128xf32, #tpu.memory_space<vmem>>, %arg7: memref<16x1xi32, #tpu.memory_space<vmem>>, %arg8: memref<16x128xf32, #tpu.memory_space<vmem>>, %arg9: memref<16x1xf32, #tpu.memory_space<vmem>>, %arg10: memref<16x1xf32, #tpu.memory_space<vmem>>, %arg11: memref<16x1xf32, #tpu.memory_space<vmem>>) attributes {dimension_semantics = [#tpu.dimension_semantics<parallel>, #tpu.dimension_semantics<arbitrary>], iteration_bounds = array<i64: 2, 4>, scalar_prefetch = 0 : i64, scratch_operands = 3 : i64, tpu.core_type = #tpu.core_type<tc>, window_params = [{transform_indices = @transform_0, window_bounds = array<i64: 16, 32>}, {transform_indices = @transform_1, window_bounds = array<i64: 16, 32>}, {transform_indices = @transform_2, window_bounds = array<i64: 32, 128>}, {transform_indices = @transform_3, window_bounds = array<i64: 32, 128>}, {transform_indices = @transform_4, window_bounds = array<i64: 1, 128>}, {transform_indices = @transform_5, window_bounds = array<i64: 16, 1>}, {transform_indices = @transform_6, window_bounds = array<i64: 16, 128>}]} {
    %c0_i32 = arith.constant 0 : i32
    %0 = arith.cmpi eq, %arg1, %c0_i32 : i32
    %1 = arith.extui %0 : i1 to i32
    %c0_i32_0 = arith.constant 0 : i32
    %2 = arith.cmpi ne, %1, %c0_i32_0 : i32
    scf.if %2 {
      %cst_30 = arith.constant 0xFF800000 : f32
      %46 = vector.broadcast %cst_30 : f32 to vector<16x1xf32>
      %c0_31 = arith.constant 0 : index
      %c0_32 = arith.constant 0 : index
      %47 = vector.load %arg9[%c0_31, %c0_32] : memref<16x1xf32, #tpu.memory_space<vmem>>, vector<16x1xf32>
      tpu.vector_store %arg9[%c0_31, %c0_32], %46 {strides = array<i32>} : memref<16x1xf32, #tpu.memory_space<vmem>>, vector<16x1xf32>,
      %cst_33 = arith.constant 0.000000e+00 : f32
      %48 = vector.broadcast %cst_33 : f32 to vector<16x1xf32>
      %c0_34 = arith.constant 0 : index
      %c0_35 = arith.constant 0 : index
      %49 = vector.load %arg10[%c0_34, %c0_35] : memref<16x1xf32, #tpu.memory_space<vmem>>, vector<16x1xf32>
      tpu.vector_store %arg10[%c0_34, %c0_35], %48 {strides = array<i32>} : memref<16x1xf32, #tpu.memory_space<vmem>>, vector<16x1xf32>,
      %cst_36 = arith.constant 0.000000e+00 : f32
      %50 = vector.broadcast %cst_36 : f32 to vector<16x1xf32>
      %c0_37 = arith.constant 0 : index
      %c0_38 = arith.constant 0 : index
      %51 = vector.load %arg11[%c0_37, %c0_38] : memref<16x1xf32, #tpu.memory_space<vmem>>, vector<16x1xf32>
      tpu.vector_store %arg11[%c0_37, %c0_38], %50 {strides = array<i32>} : memref<16x1xf32, #tpu.memory_space<vmem>>, vector<16x1xf32>,
    } else {
    }
    %c0 = arith.constant 0 : index
    %c0_1 = arith.constant 0 : index
    %3 = vector.load %arg2[%c0, %c0_1] : memref<16x32xbf16, #tpu.memory_space<vmem>>, vector<16x32xbf16>
    %c0_2 = arith.constant 0 : index
    %c0_3 = arith.constant 0 : index
    %4 = vector.load %arg4[%c0_2, %c0_3] : memref<32x128xbf16, #tpu.memory_space<vmem>>, vector<32x128xbf16>
    %cst = arith.constant dense<0.000000e+00> : vector<16x128xf32>
    %5 = tpu.matmul %3, %4, %cst {dimension_numbers = #tpu.dot_dimension_numbers<[1], [0], [0], [1], [0, 0, 1, 1], [], []>} : vector<16x32xbf16>, vector<32x128xbf16>, vector<16x128xf32> -> vector<16x128xf32>
    %c0_4 = arith.constant 0 : index
    %c0_5 = arith.constant 0 : index
    %6 = vector.load %arg3[%c0_4, %c0_5] : memref<16x32xbf16, #tpu.memory_space<vmem>>, vector<16x32xbf16>
    %c0_6 = arith.constant 0 : index
    %c0_7 = arith.constant 0 : index
    %7 = vector.load %arg5[%c0_6, %c0_7] : memref<32x128xbf16, #tpu.memory_space<vmem>>, vector<32x128xbf16>
    %cst_8 = arith.constant dense<0.000000e+00> : vector<16x128xf32>
    %8 = tpu.matmul %6, %7, %cst_8 {dimension_numbers = #tpu.dot_dimension_numbers<[1], [0], [0], [1], [0, 0, 1, 1], [], []>} : vector<16x32xbf16>, vector<32x128xbf16>, vector<16x128xf32> -> vector<16x128xf32>
    %9 = arith.addf %5, %8 : vector<16x128xf32>
    %c0_9 = arith.constant 0 : index
    %c0_10 = arith.constant 0 : index
    %10 = vector.load %arg6[%c0_9, %c0_10] : memref<1x128xf32, #tpu.memory_space<vmem>>, vector<1x128xf32>
    %11 = vector.broadcast %10 : vector<1x128xf32> to vector<16x128xf32>
    %12 = arith.addf %9, %11 : vector<16x128xf32>
    %c0_11 = arith.constant 0 : index
    %c0_12 = arith.constant 0 : index
    %13 = vector.load %arg7[%c0_11, %c0_12] : memref<16x1xi32, #tpu.memory_space<vmem>>, vector<16x1xi32>
    %c128_i32 = arith.constant 128 : i32
    %14 = arith.muli %arg1, %c128_i32 : i32
    %15 = vector.broadcast %14 : i32 to vector<16x1xi32>
    %16 = arith.subi %13, %15 : vector<16x1xi32>
    %17 = tpu.iota {dimensions = array<i32: 1>} : vector<16x128xi32>
    %18 = vector.broadcast %16 : vector<16x1xi32> to vector<16x128xi32>
    %19 = arith.cmpi eq, %17, %18 : vector<16x128xi32>
    %c0_13 = arith.constant 0 : index
    %c0_14 = arith.constant 0 : index
    %20 = vector.load %arg11[%c0_13, %c0_14] : memref<16x1xf32, #tpu.memory_space<vmem>>, vector<16x1xf32>
    %cst_15 = arith.constant 0.000000e+00 : f32
    %21 = vector.broadcast %cst_15 : f32 to vector<16x128xf32>
    %22 = arith.select %19, %12, %21 : vector<16x128xi1>, vector<16x128xf32>
    %cst_16 = arith.constant dense<0.000000e+00> : vector<16xf32>
    %23 = vector.multi_reduction <add>, %22, %cst_16 [1] : vector<16x128xf32> to vector<16xf32>
    %24 = vector.shape_cast %23 : vector<16xf32> to vector<16x1xf32>
    %25 = arith.addf %20, %24 : vector<16x1xf32>
    %c0_17 = arith.constant 0 : index
    %c0_18 = arith.constant 0 : index
    %26 = vector.load %arg11[%c0_17, %c0_18] : memref<16x1xf32, #tpu.memory_space<vmem>>, vector<16x1xf32>
    tpu.vector_store %arg11[%c0_17, %c0_18], %25 {strides = array<i32>} : memref<16x1xf32, #tpu.memory_space<vmem>>, vector<16x1xf32>,
    %c0_19 = arith.constant 0 : index
    %c0_20 = arith.constant 0 : index
    %27 = vector.load %arg9[%c0_19, %c0_20] : memref<16x1xf32, #tpu.memory_space<vmem>>, vector<16x1xf32>
    %cst_21 = arith.constant dense<0xFF800000> : vector<16xf32>
    %28 = vector.multi_reduction <maximumf>, %12, %cst_21 [1] : vector<16x128xf32> to vector<16xf32>
    %29 = vector.shape_cast %28 : vector<16xf32> to vector<16x1xf32>
    %30 = arith.maximumf %27, %29 : vector<16x1xf32>
    %c0_22 = arith.constant 0 : index
    %c0_23 = arith.constant 0 : index
    %31 = vector.load %arg10[%c0_22, %c0_23] : memref<16x1xf32, #tpu.memory_space<vmem>>, vector<16x1xf32>
    %32 = arith.subf %27, %30 : vector<16x1xf32>
    %33 = math.exp %32 : vector<16x1xf32>
    %34 = arith.mulf %31, %33 : vector<16x1xf32>
    %35 = vector.broadcast %30 : vector<16x1xf32> to vector<16x128xf32>
    %36 = arith.subf %12, %35 : vector<16x128xf32>
    %37 = math.exp %36 : vector<16x128xf32>
    %cst_24 = arith.constant dense<0.000000e+00> : vector<16xf32>
    %38 = vector.multi_reduction <add>, %37, %cst_24 [1] : vector<16x128xf32> to vector<16xf32>
    %39 = vector.shape_cast %38 : vector<16xf32> to vector<16x1xf32>
    %40 = arith.addf %34, %39 : vector<16x1xf32>
    %c0_25 = arith.constant 0 : index
    %c0_26 = arith.constant 0 : index
    %41 = vector.load %arg10[%c0_25, %c0_26] : memref<16x1xf32, #tpu.memory_space<vmem>>, vector<16x1xf32>
    tpu.vector_store %arg10[%c0_25, %c0_26], %40 {strides = array<i32>} : memref<16x1xf32, #tpu.memory_space<vmem>>, vector<16x1xf32>,
    %c0_27 = arith.constant 0 : index
    %c0_28 = arith.constant 0 : index
    %42 = vector.load %arg9[%c0_27, %c0_28] : memref<16x1xf32, #tpu.memory_space<vmem>>, vector<16x1xf32>
    tpu.vector_store %arg9[%c0_27, %c0_28], %30 {strides = array<i32>} : memref<16x1xf32, #tpu.memory_space<vmem>>, vector<16x1xf32>,
    %c3_i32 = arith.constant 3 : i32
    %43 = arith.cmpi eq, %arg1, %c3_i32 : i32
    %44 = arith.extui %43 : i1 to i32
    %c0_i32_29 = arith.constant 0 : i32
    %45 = arith.cmpi ne, %44, %c0_i32_29 : i32
    scf.if %45 {
      %c0_30 = arith.constant 0 : index
      %c0_31 = arith.constant 0 : index
      %46 = vector.load %arg11[%c0_30, %c0_31] : memref<16x1xf32, #tpu.memory_space<vmem>>, vector<16x1xf32>
      %c0_32 = arith.constant 0 : index
      %c0_33 = arith.constant 0 : index
      %47 = vector.load %arg9[%c0_32, %c0_33] : memref<16x1xf32, #tpu.memory_space<vmem>>, vector<16x1xf32>
      %c0_34 = arith.constant 0 : index
      %c0_35 = arith.constant 0 : index
      %48 = vector.load %arg10[%c0_34, %c0_35] : memref<16x1xf32, #tpu.memory_space<vmem>>, vector<16x1xf32>
      %49 = math.log %48 : vector<16x1xf32>
      %50 = arith.addf %47, %49 : vector<16x1xf32>
      %51 = arith.subf %46, %50 : vector<16x1xf32>
      %52 = vector.shape_cast %51 : vector<16x1xf32> to vector<16x1xf32>
      %53 = vector.broadcast %52 : vector<16x1xf32> to vector<16x128xf32>
      %c0_36 = arith.constant 0 : index
      %c0_37 = arith.constant 0 : index
      %54 = vector.load %arg8[%c0_36, %c0_37] : memref<16x128xf32, #tpu.memory_space<vmem>>, vector<16x128xf32>
      tpu.vector_store %arg8[%c0_36, %c0_37], %53 {strides = array<i32>} : memref<16x128xf32, #tpu.memory_space<vmem>>, vector<16x128xf32>,
    } else {
    }
    return
  }
  func.func @transform_0(%arg0: i32, %arg1: i32) -> (i32, i32) {
    %c0_i32 = arith.constant 0 : i32
    %c0_i32_0 = arith.constant 0 : i32
    return %arg0, %c0_i32 : i32, i32
  }
  func.func @transform_1(%arg0: i32, %arg1: i32) -> (i32, i32) {
    %c0_i32 = arith.constant 0 : i32
    %c0_i32_0 = arith.constant 0 : i32
    return %arg0, %c0_i32 : i32, i32
  }
  func.func @transform_2(%arg0: i32, %arg1: i32) -> (i32, i32) {
    %c0_i32 = arith.constant 0 : i32
    %c0_i32_0 = arith.constant 0 : i32
    return %c0_i32, %arg1 : i32, i32
  }
  func.func @transform_3(%arg0: i32, %arg1: i32) -> (i32, i32) {
    %c0_i32 = arith.constant 0 : i32
    %c0_i32_0 = arith.constant 0 : i32
    return %c0_i32, %arg1 : i32, i32
  }
  func.func @transform_4(%arg0: i32, %arg1: i32) -> (i32, i32) {
    %c0_i32 = arith.constant 0 : i32
    %c0_i32_0 = arith.constant 0 : i32
    return %c0_i32, %arg1 : i32, i32
  }
  func.func @transform_5(%arg0: i32, %arg1: i32) -> (i32, i32) {
    %c0_i32 = arith.constant 0 : i32
    %c0_i32_0 = arith.constant 0 : i32
    return %arg0, %c0_i32 : i32, i32
  }
  func.func @transform_6(%arg0: i32, %arg1: i32) -> (i32, i32) {
    %c0_i32 = arith.constant 0 : i32
    %c0_i32_0 = arith.constant 0 : i32
    return %arg0, %c0_i32 : i32, i32
  }
}

</mosaic_0001>

<llo_original>
// kernel: tpu_custom_call.1
$region0: #{tpu_custom_call.1}
  #allocation0 [shape = 'u32[]', space=smem, size = 0x4, offset = 0x4, fixed_abs, tag = 'smem constant byte address 0x4 - core index']
  #allocation1 [shape = 'u32[72,128]{1,0:T(1,128)}', space=vmem, size = 0x9000, scoped, tag = 'internal scratch']
  #allocation2 [shape = 'f32[16,1]{1,0:T(8,128)}', space=vmem, size = 0x2000, scoped, tag = 'scratch operand']
  #allocation3 [shape = 'f32[16,1]{1,0:T(8,128)}', space=vmem, size = 0x2000, scoped, tag = 'scratch operand']
  #allocation4 [shape = 'f32[16,1]{1,0:T(8,128)}', space=vmem, size = 0x2000, scoped, tag = 'scratch operand']
  %s0 = inlined_call_operand.vmem [shape: bf16[32,32], index: 0, kind: input, shape index: {}]
  %s1 = inlined_call_operand.vmem [shape: bf16[32,32], index: 1, kind: input, shape index: {}]
  %s2 = inlined_call_operand.hbm [shape: bf16[32,512], index: 2, kind: input, shape index: {}]
  %s3 = inlined_call_operand.hbm [shape: bf16[32,512], index: 3, kind: input, shape index: {}]
  %s4 = inlined_call_operand.vmem [shape: f32[1,512], index: 4, kind: input, shape index: {}]
  %s5 = inlined_call_operand.vmem [shape: s32[32,1], index: 5, kind: input, shape index: {}]
  %s6 = inlined_call_operand.hbm [shape: f32[32,128], index: 6, kind: output, shape index: {}]
  %s7 = sld [smem:[#allocation0]]
  $region73: #{tpu_custom_call.1} parent=0
    _
  %s9 = ssub.s32 1, %s7
  %s10 = scalar_select 0, %s9, %s7
  $region1: #{tpu_custom_call.1} parent=0
    #allocation5 [shape = 'u8[16384]{0}', space=vmem, size = 0x4000, scoped, tag = 'input window, operand 2']
    #allocation6 [shape = 's32[2]{0}', space=sflag, size = 0x8, scoped, tag = 'scoped memory for tpu_custom_call.1']
    #allocation7 [shape = 's32[2]{0}', space=sflag, size = 0x8, scoped, tag = 'scoped memory for tpu_custom_call.1']
    #allocation8 [shape = 'u8[16384]{0}', space=vmem, size = 0x4000, scoped, tag = 'input window, operand 3']
    #allocation9 [shape = 's32[2]{0}', space=sflag, size = 0x8, scoped, tag = 'scoped memory for tpu_custom_call.1']
    #allocation10 [shape = 'u8[16384]{0}', space=vmem, size = 0x4000, scoped, tag = 'output window, operand 0']
    %11 = vsyncpa [#allocation6], 0
    %s12 = scalar_lea.sflag [#allocation6], 1
    %13 = vsyncpa %s12, 0
    %14 = vsyncpa [#allocation9], 0
    %s15 = scalar_lea.sflag [#allocation9], 1
    %16 = vsyncpa %s15, 0
    %17 = vsyncpa [#allocation7], 0
    %s18 = scalar_lea.sflag [#allocation7], 1
    %19 = vsyncpa %s18, 0
    loop: start=0, step=1, limit=10
    $region2: #{tpu_custom_call.1} parent=1 // loop_pre_header
      _
    $region3: #{tpu_custom_call.1} parent=1 // loop_header
      %s21 = sphi 0, %s25
      %p22 = scmp.ge.s32.totalorder %s21, 10
      %s28 = sphi 0, %s40
      %s29 = sphi 0, %s36
      %s30 = sphi 0, %s28
      %s31 = sphi 0, %s29
      %s32 = sphi 0, %s30
      %s33 = sphi 0, %s31
      %s43 = sphi 0, %s45
      %s46 = sphi 0, %s43
      %s47 = sphi 0, %s46
      %s63 = sphi 0, %s47
      %s69 = sphi 0, %s71
      %s72 = sphi 0, %s69
      %s73 = sphi 0, %s72
      %s89 = sphi 0, %s73
      %s95 = sphi 0, %s97
      %s98 = sphi 0, %s95
      %s99 = sphi 0, %s98
      %s115 = sphi 0, %s99
      %s121 = sphi 0, %s123
      %s124 = sphi 0, %s121
      %s125 = sphi 0, %s124
      %s141 = sphi 0, %s125
      %s147 = sphi 0, %s149
      %s150 = sphi 0, %s147
      %s151 = sphi 0, %s150
      %s167 = sphi 0, %s151
      %s173 = sphi 0, %s175
      %s176 = sphi 0, %s173
      %s177 = sphi 0, %s176
      %s193 = sphi 0, %s177
      %s199 = sphi 0, %s201
      %s202 = sphi 0, %s199
      %s203 = sphi 0, %s202
      %s219 = sphi 0, %s203
    $region4: #{tpu_custom_call.1} parent=1 // loop_header_branch
      %24 = sbr.rel (%p22) target = $region8
    $region5: #{tpu_custom_call.1} parent=1 // loop_body
      %s26 = ssub.s32 %s21, 1
      %s27 = ssub.s32 %s21, 2
      %s34 = sadd.s32 1, %s29
      %p35 = scmp.ge.s32.totalorder %s34, 4
      %s36 = scalar_select %p35, 0, %s34
      %s37 = sadd.s32 1, %s28
      %s38 = scalar_select %p35, %s37, %s28
      %p39 = scmp.ge.s32.totalorder %s38, 2
      %s40 = scalar_select %p39, 0, %s38
      %s41 = ssub.s32 %s28, %s40
      %p42 = scmp.eq.s32.totalorder %s41, 0
      %s44 = sadd.s32 %s43, 1
      %s45 = scalar_select %p42, %s43, %s44
      %p48 = pneg %p42
      %p49 = scmp.eq.s32.totalorder %s21, 7
      %p50 = por %p48, %p49
      %p51 = scmp.ne.s32.totalorder %s43, %s46
      %p52 = scmp.eq.s32.totalorder %s21, 0
      %p53 = por %p51, %p52
      %p54 = scmp.ne.s32.totalorder %s43, %s46
      %p55 = scmp.eq.s32.totalorder %s26, 7
      %p56 = por %p54, %p55
      %p57 = scmp.ne.s32.totalorder %s46, %s47
      %p58 = scmp.eq.s32.totalorder %s26, 0
      %p59 = por %p57, %p58
      %p60 = scmp.ne.s32.totalorder %s46, %s47
      %p61 = scmp.eq.s32.totalorder %s27, 7
      %p62 = por %p60, %p61
      %p64 = scmp.ne.s32.totalorder %s47, %s63
      %p65 = scmp.eq.s32.totalorder %s27, 0
      %p66 = por %p64, %p65
      %s67 = ssub.s32 %s28, %s40
      %p68 = scmp.eq.s32.totalorder %s67, 0
      %s70 = sadd.s32 %s69, 1
      %s71 = scalar_select %p68, %s69, %s70
      %p74 = pneg %p68
      %p75 = scmp.eq.s32.totalorder %s21, 7
      %p76 = por %p74, %p75
      %p77 = scmp.ne.s32.totalorder %s69, %s72
      %p78 = scmp.eq.s32.totalorder %s21, 0
      %p79 = por %p77, %p78
      %p80 = scmp.ne.s32.totalorder %s69, %s72
      %p81 = scmp.eq.s32.totalorder %s26, 7
      %p82 = por %p80, %p81
      %p83 = scmp.ne.s32.totalorder %s72, %s73
      %p84 = scmp.eq.s32.totalorder %s26, 0
      %p85 = por %p83, %p84
      %p86 = scmp.ne.s32.totalorder %s72, %s73
      %p87 = scmp.eq.s32.totalorder %s27, 7
      %p88 = por %p86, %p87
      %p90 = scmp.ne.s32.totalorder %s73, %s89
      %p91 = scmp.eq.s32.totalorder %s27, 0
      %p92 = por %p90, %p91
      %s93 = ssub.s32 %s29, %s36
      %p94 = scmp.eq.s32.totalorder %s93, 0
      %s96 = sadd.s32 %s95, 1
      %s97 = scalar_select %p94, %s95, %s96
      %p100 = pneg %p94
      %p101 = scmp.eq.s32.totalorder %s21, 7
      %p102 = por %p100, %p101
      %p103 = scmp.ne.s32.totalorder %s95, %s98
      %p104 = scmp.eq.s32.totalorder %s21, 0
      %p105 = por %p103, %p104
      %p106 = scmp.ne.s32.totalorder %s95, %s98
      %p107 = scmp.eq.s32.totalorder %s26, 7
      %p108 = por %p106, %p107
      %p109 = scmp.ne.s32.totalorder %s98, %s99
      %p110 = scmp.eq.s32.totalorder %s26, 0
      %p111 = por %p109, %p110
      %p112 = scmp.ne.s32.totalorder %s98, %s99
      %p113 = scmp.eq.s32.totalorder %s27, 7
      %p114 = por %p112, %p113
      %p116 = scmp.ne.s32.totalorder %s99, %s115
      %p117 = scmp.eq.s32.totalorder %s27, 0
      %p118 = por %p116, %p117
      %s119 = ssub.s32 %s29, %s36
      %p120 = scmp.eq.s32.totalorder %s119, 0
      %s122 = sadd.s32 %s121, 1
      %s123 = scalar_select %p120, %s121, %s122
      %p126 = pneg %p120
      %p127 = scmp.eq.s32.totalorder %s21, 7
      %p128 = por %p126, %p127
      %p129 = scmp.ne.s32.totalorder %s121, %s124
      %p130 = scmp.eq.s32.totalorder %s21, 0
      %p131 = por %p129, %p130
      %p132 = scmp.ne.s32.totalorder %s121, %s124
      %p133 = scmp.eq.s32.totalorder %s26, 7
      %p134 = por %p132, %p133
      %p135 = scmp.ne.s32.totalorder %s124, %s125
      %p136 = scmp.eq.s32.totalorder %s26, 0
      %p137 = por %p135, %p136
      %p138 = scmp.ne.s32.totalorder %s124, %s125
      %p139 = scmp.eq.s32.totalorder %s27, 7
      %p140 = por %p138, %p139
      %p142 = scmp.ne.s32.totalorder %s125, %s141
      %p143 = scmp.eq.s32.totalorder %s27, 0
      %p144 = por %p142, %p143
      %s145 = ssub.s32 %s29, %s36
      %p146 = scmp.eq.s32.totalorder %s145, 0
      %s148 = sadd.s32 %s147, 1
      %s149 = scalar_select %p146, %s147, %s148
      %p152 = pneg %p146
      %p153 = scmp.eq.s32.totalorder %s21, 7
      %p154 = por %p152, %p153
      %p155 = scmp.ne.s32.totalorder %s147, %s150
      %p156 = scmp.eq.s32.totalorder %s21, 0
      %p157 = por %p155, %p156
      %p158 = scmp.ne.s32.totalorder %s147, %s150
      %p159 = scmp.eq.s32.totalorder %s26, 7
      %p160 = por %p158, %p159
      %p161 = scmp.ne.s32.totalorder %s150, %s151
      %p162 = scmp.eq.s32.totalorder %s26, 0
      %p163 = por %p161, %p162
      %p164 = scmp.ne.s32.totalorder %s150, %s151
      %p165 = scmp.eq.s32.totalorder %s27, 7
      %p166 = por %p164, %p165
      %p168 = scmp.ne.s32.totalorder %s151, %s167
      %p169 = scmp.eq.s32.totalorder %s27, 0
      %p170 = por %p168, %p169
      %s171 = ssub.s32 %s28, %s40
      %p172 = scmp.eq.s32.totalorder %s171, 0
      %s174 = sadd.s32 %s173, 1
      %s175 = scalar_select %p172, %s173, %s174
      %p178 = pneg %p172
      %p179 = scmp.eq.s32.totalorder %s21, 7
      %p180 = por %p178, %p179
      %p181 = scmp.ne.s32.totalorder %s173, %s176
      %p182 = scmp.eq.s32.totalorder %s21, 0
      %p183 = por %p181, %p182
      %p184 = scmp.ne.s32.totalorder %s173, %s176
      %p185 = scmp.eq.s32.totalorder %s26, 7
      %p186 = por %p184, %p185
      %p187 = scmp.ne.s32.totalorder %s176, %s177
      %p188 = scmp.eq.s32.totalorder %s26, 0
      %p189 = por %p187, %p188
      %p190 = scmp.ne.s32.totalorder %s176, %s177
      %p191 = scmp.eq.s32.totalorder %s27, 7
      %p192 = por %p190, %p191
      %p194 = scmp.ne.s32.totalorder %s177, %s193
      %p195 = scmp.eq.s32.totalorder %s27, 0
      %p196 = por %p194, %p195
      %s197 = ssub.s32 %s28, %s40
      %p198 = scmp.eq.s32.totalorder %s197, 0
      %s200 = sadd.s32 %s199, 1
      %s201 = scalar_select %p198, %s199, %s200
      %p204 = pneg %p198
      %p205 = scmp.eq.s32.totalorder %s21, 7
      %p206 = por %p204, %p205
      %p207 = scmp.ne.s32.totalorder %s199, %s202
      %p208 = scmp.eq.s32.totalorder %s21, 0
      %p209 = por %p207, %p208
      %p210 = scmp.ne.s32.totalorder %s199, %s202
      %p211 = scmp.eq.s32.totalorder %s26, 7
      %p212 = por %p210, %p211
      %p213 = scmp.ne.s32.totalorder %s202, %s203
      %p214 = scmp.eq.s32.totalorder %s26, 0
      %p215 = por %p213, %p214
      %p216 = scmp.ne.s32.totalorder %s202, %s203
      %p217 = scmp.eq.s32.totalorder %s27, 7
      %p218 = por %p216, %p217
      %p220 = scmp.ne.s32.totalorder %s203, %s219
      %p221 = scmp.eq.s32.totalorder %s27, 0
      %p222 = por %p220, %p221
      %p223 = scmp.le.s32.totalorder 1, %s21
      %p224 = scmp.lt.s32.totalorder %s21, 9
      %p225 = pnand %p223, %p224
      %p226 = pneg %p225
      // Predicated region
      $region9: #{tpu_custom_call.1} parent=5 // pred_check
        _
      $region10: #{tpu_custom_call.1} parent=5 // pred_check_branch
        %228 = sbr.rel (%p225) target = $region12
      $region11: #{tpu_custom_call.1} parent=5 // pred_region
        %s229 = ssub.s32 %s21, 1
      $region12: #{tpu_custom_call.1} parent=5 // pred_fallthru
        _
      %p230 = scmp.lt.s32.totalorder %s21, 8
      // Predicated region
      $region13: #{tpu_custom_call.1} parent=5 // pred_check
        %p231 = pneg %p230
      $region14: #{tpu_custom_call.1} parent=5 // pred_check_branch
        %233 = sbr.rel (%p231) target = $region16
      $region15: #{tpu_custom_call.1} parent=5 // pred_region
        // Predicated region
        $region17: #{tpu_custom_call.1} parent=15 // pred_check
          %p234 = pneg %p53
        $region18: #{tpu_custom_call.1} parent=15 // pred_check_branch
          %236 = sbr.rel (%p234) target = $region20
        $region19: #{tpu_custom_call.1} parent=15 // pred_region
          %s237 = smul.u32 2, %s28
          %p238 = scmp.lt.s32.totalorder %s237, 3
          %s239 = scalar_select %p238, %s237, 3
          %s240 = smul.addr %s239, 4
          %s241 = scalar_lea.vmem %s0, %s240
          %s242 = smul.u32 2, %s28
        $region20: #{tpu_custom_call.1} parent=15 // pred_fallthru
          _
        // Predicated region
        $region21: #{tpu_custom_call.1} parent=15 // pred_check
          %p243 = pneg %p79
        $region22: #{tpu_custom_call.1} parent=15 // pred_check_branch
          %245 = sbr.rel (%p243) target = $region24
        $region23: #{tpu_custom_call.1} parent=15 // pred_region
          %s246 = smul.u32 2, %s28
          %p247 = scmp.lt.s32.totalorder %s246, 3
          %s248 = scalar_select %p247, %s246, 3
          %s249 = smul.addr %s248, 4
          %s250 = scalar_lea.vmem %s1, %s249
          %s251 = smul.u32 2, %s28
        $region24: #{tpu_custom_call.1} parent=15 // pred_fallthru
          _
        // Predicated region
        $region25: #{tpu_custom_call.1} parent=15 // pred_check
          %p252 = pneg %p105
        $region26: #{tpu_custom_call.1} parent=15 // pred_check_branch
          %254 = sbr.rel (%p252) target = $region28
        $region27: #{tpu_custom_call.1} parent=15 // pred_region
          %s255 = sand.u32 %s95, 1
          %s256 = scalar_lea.sflag [#allocation6], %s255
          %s257 = sand.u32 %s95, 1
          %s258 = smul.addr %s257, 16
          %s259 = scalar_lea.vmem [#allocation5], %s258
          %261 = vsyncadd %s256, 0
          %s262 = smul.addr %s29, 4
          %s263 = scalar_lea.hbm %s2, %s262
          %s264 = sshll.u32 %s263, 4
          %s265 = int_to_ptr.hbm [resolvable:$true] %s264
          %s266 = sshll.u32 %s259, 4
          %s267 = int_to_ptr.vmem [resolvable:$true] %s266
          %272 = dma.hbm_to_vmem [thread:$0]  %s265, 256, %s267, %s256, 256, 64, 4
        $region28: #{tpu_custom_call.1} parent=15 // pred_fallthru
          _
        // Predicated region
        $region29: #{tpu_custom_call.1} parent=15 // pred_check
          %p273 = pneg %p131
        $region30: #{tpu_custom_call.1} parent=15 // pred_check_branch
          %275 = sbr.rel (%p273) target = $region32
        $region31: #{tpu_custom_call.1} parent=15 // pred_region
          %s276 = sand.u32 %s121, 1
          %s277 = scalar_lea.sflag [#allocation9], %s276
          %s278 = sand.u32 %s121, 1
          %s279 = smul.addr %s278, 16
          %s280 = scalar_lea.vmem [#allocation8], %s279
          %282 = vsyncadd %s277, 0
          %s283 = smul.addr %s29, 4
          %s284 = scalar_lea.hbm %s3, %s283
          %s285 = sshll.u32 %s284, 4
          %s286 = int_to_ptr.hbm [resolvable:$true] %s285
          %s287 = sshll.u32 %s280, 4
          %s288 = int_to_ptr.vmem [resolvable:$true] %s287
          %293 = dma.hbm_to_vmem [thread:$0]  %s286, 256, %s288, %s277, 256, 64, 4
        $region32: #{tpu_custom_call.1} parent=15 // pred_fallthru
          _
        // Predicated region
        $region33: #{tpu_custom_call.1} parent=15 // pred_check
          %p294 = pneg %p157
        $region34: #{tpu_custom_call.1} parent=15 // pred_check_branch
          %296 = sbr.rel (%p294) target = $region36
        $region35: #{tpu_custom_call.1} parent=15 // pred_region
          %p297 = scmp.lt.s32.totalorder %s29, 3
          %s298 = scalar_select %p297, %s29, 3
          %s299 = scalar_lea.vmem %s4, %s298
        $region36: #{tpu_custom_call.1} parent=15 // pred_fallthru
          _
        // Predicated region
        $region37: #{tpu_custom_call.1} parent=15 // pred_check
          %p300 = pneg %p183
        $region38: #{tpu_custom_call.1} parent=15 // pred_check_branch
          %302 = sbr.rel (%p300) target = $region40
        $region39: #{tpu_custom_call.1} parent=15 // pred_region
          %s303 = smul.u32 2, %s28
          %p304 = scmp.lt.s32.totalorder %s303, 3
          %s305 = scalar_select %p304, %s303, 3
          %s306 = smul.addr %s305, 8
          %s307 = scalar_lea.vmem %s5, %s306
          %s308 = smul.u32 2, %s28
        $region40: #{tpu_custom_call.1} parent=15 // pred_fallthru
          _
      $region16: #{tpu_custom_call.1} parent=5 // pred_fallthru
        _
      %p309 = scmp.le.s32.totalorder 1, %s21
      %p310 = scmp.lt.s32.totalorder %s21, 9
      %p311 = pnand %p309, %p310
      %p312 = pneg %p311
      // Predicated region
      $region41: #{tpu_custom_call.1} parent=5 // pred_check
        _
      $region42: #{tpu_custom_call.1} parent=5 // pred_check_branch
        %314 = sbr.rel (%p311) target = $region44
      $region43: #{tpu_custom_call.1} parent=5 // pred_region
        %s315 = ssub.s32 %s21, 1
        %s316 = sand.u32 %s98, 1
        %s317 = scalar_lea.sflag [#allocation6], %s316
        %s318 = sand.u32 %s98, 1
        %s319 = smul.addr %s318, 16
        %s320 = scalar_lea.vmem [#allocation5], %s319
        // Predicated region
        $region45: #{tpu_custom_call.1} parent=43 // pred_check
          %p321 = pneg %p111
        $region46: #{tpu_custom_call.1} parent=43 // pred_check_branch
          %323 = sbr.rel (%p321) target = $region48
        $region47: #{tpu_custom_call.1} parent=43 // pred_region
          %325 = dma.done %s317, 256
        $region48: #{tpu_custom_call.1} parent=43 // pred_fallthru
          _
        %s326 = sand.u32 %s124, 1
        %s327 = scalar_lea.sflag [#allocation9], %s326
        %s328 = sand.u32 %s124, 1
        %s329 = smul.addr %s328, 16
        %s330 = scalar_lea.vmem [#allocation8], %s329
        // Predicated region
        $region49: #{tpu_custom_call.1} parent=43 // pred_check
          %p331 = pneg %p137
        $region50: #{tpu_custom_call.1} parent=43 // pred_check_branch
          %333 = sbr.rel (%p331) target = $region52
        $region51: #{tpu_custom_call.1} parent=43 // pred_region
          %335 = dma.done %s327, 256
        $region52: #{tpu_custom_call.1} parent=43 // pred_fallthru
          _
        %s336 = smul.u32 2, %s30
        %p337 = scmp.lt.s32.totalorder %s336, 3
        %s338 = scalar_select %p337, %s336, 3
        %s339 = smul.addr %s338, 4
        %s340 = scalar_lea.vmem %s0, %s339
        %p341 = pneg %p59
        %p342 = pneg %p56
        %s343 = smul.u32 2, %s30
        %p344 = scmp.lt.s32.totalorder %s343, 3
        %s345 = scalar_select %p344, %s343, 3
        %s346 = smul.addr %s345, 4
        %s347 = scalar_lea.vmem %s1, %s346
        %p348 = pneg %p85
        %p349 = pneg %p82
        %s350 = sand.u32 %s98, 1
        %s351 = scalar_lea.sflag [#allocation6], %s350
        %s352 = sand.u32 %s98, 1
        %s353 = smul.addr %s352, 16
        %s354 = scalar_lea.vmem [#allocation5], %s353
        %p355 = pneg %p111
        %p356 = pneg %p108
        %s357 = sand.u32 %s124, 1
        %s358 = scalar_lea.sflag [#allocation9], %s357
        %s359 = sand.u32 %s124, 1
        %s360 = smul.addr %s359, 16
        %s361 = scalar_lea.vmem [#allocation8], %s360
        %p362 = pneg %p137
        %p363 = pneg %p134
        %p364 = scmp.lt.s32.totalorder %s31, 3
        %s365 = scalar_select %p364, %s31, 3
        %s366 = scalar_lea.vmem %s4, %s365
        %p367 = pneg %p163
        %p368 = pneg %p160
        %s369 = smul.u32 2, %s30
        %p370 = scmp.lt.s32.totalorder %s369, 3
        %s371 = scalar_select %p370, %s369, 3
        %s372 = smul.addr %s371, 8
        %s373 = scalar_lea.vmem %s5, %s372
        %p374 = pneg %p189
        %p375 = pneg %p186
        %p376 = pneg %p215
        %p377 = pneg %p212
        %s378 = sand.u32 %s202, 1
        %s379 = scalar_lea.sflag [#allocation7], %s378
        %s380 = sand.u32 %s202, 1
        %s381 = smul.addr %s380, 16
        %s382 = scalar_lea.vmem [#allocation10], %s381
        %s383 = smul.u32 2, %s30
        %p384 = scmp.lt.s32.totalorder %s383, 3
        %s385 = scalar_select %p384, %s383, 3
        %s386 = smul.addr %s385, 4
        %s387 = scalar_lea.vmem %s0, %s386
        %s388 = smul.u32 2, %s30
        %s389 = smul.u32 2, %s30
        %p390 = scmp.lt.s32.totalorder %s389, 3
        %s391 = scalar_select %p390, %s389, 3
        %s392 = smul.addr %s391, 4
        %s393 = scalar_lea.vmem %s1, %s392
        %s394 = smul.u32 2, %s30
        %p395 = scmp.lt.s32.totalorder %s31, 3
        %s396 = scalar_select %p395, %s31, 3
        %s397 = scalar_lea.vmem %s4, %s396
        %s398 = smul.u32 2, %s30
        %p399 = scmp.lt.s32.totalorder %s398, 3
        %s400 = scalar_select %p399, %s398, 3
        %s401 = smul.addr %s400, 8
        %s402 = scalar_lea.vmem %s5, %s401
        %s403 = smul.u32 2, %s30
        %s404 = smul.u32 2, %s30
        %p406 = scmp.eq.s32.totalorder %s31, 0
        // Predicated region
        $region53: #{tpu_custom_call.1} parent=43 // pred_check
          %p407 = pneg %p406
        $region54: #{tpu_custom_call.1} parent=43 // pred_check_branch
          %409 = sbr.rel (%p407) target = $region56
        $region55: #{tpu_custom_call.1} parent=43 // pred_region
          %vm410 = vcmask 7168
          %411 = vst.msk [vmem:[#allocation2] sm:$0xff] %vm410, -inf
          %412 = vst.msk [vmem:[#allocation2 + $0x8] sm:$0xff] %vm410, -inf
          %413 = vst.msk [vmem:[#allocation3] sm:$0xff] %vm410, 0.0
          %414 = vst.msk [vmem:[#allocation3 + $0x8] sm:$0xff] %vm410, 0.0
          %415 = vst.msk [vmem:[#allocation4] sm:$0xff] %vm410, 0.0
          %416 = vst.msk [vmem:[#allocation4 + $0x8] sm:$0xff] %vm410, 0.0
        $region56: #{tpu_custom_call.1} parent=43 // pred_fallthru
          _
        %v417 = vld [vmem:[%s387] sm:$0xf]
        %v418 = vld [vmem:[%s387 + $0x4] sm:$0xf]
        %v419 = vld [vmem:[%s320] sm:$0xf]
        %v420 = vld [vmem:[%s320 + $0x4] sm:$0xf]
        %v421 = vld [vmem:[%s320 + $0x8] sm:$0xf]
        %v422 = vld [vmem:[%s320 + $0xc] sm:$0xf]
        %v423 = vld [vmem:[%s393] sm:$0xf]
        %v424 = vld [vmem:[%s393 + $0x4] sm:$0xf]
        %v425 = vld [vmem:[%s330] sm:$0xf]
        %v426 = vld [vmem:[%s330 + $0x4] sm:$0xf]
        %v427 = vld [vmem:[%s330 + $0x8] sm:$0xf]
        %v428 = vld [vmem:[%s330 + $0xc] sm:$0xf]
        %v431 = vunpack.c.l.b16 %v423
        %v432 = vunpack.c.l.b16 %v424
        %v433 = vpack.c.b16 %v432, %v431
        %v438 = vunpack.c.l.b16 %v425
        %v439 = vunpack.c.l.b16 %v426
        %v440 = vunpack.c.l.b16 %v427
        %v441 = vunpack.c.l.b16 %v428
        %v442 = vpack.c.b16 %v439, %v438
        %v443 = vpack.c.b16 %v441, %v440
        %vm446 = vcmask 261120
        %v448 = vsel %vm446, %v433, 0
        %450 = vmatpush.bf16.msra.mxu0 0
        %451 = vmatpush.bf16.msra.mxu0 0
        %452 = vmatpush.bf16.msra.mxu0 0
        %453 = vmatpush.bf16.msra.mxu0 0
        %454 = vmatpush.bf16.msra.mxu0 0
        %455 = vmatpush.bf16.msra.mxu0 0
        %456 = vmatpush.bf16.msra.mxu0 %v443
        %457 = vmatpush.bf16.msra.mxu0 %v442
        %458 = vmatmul.bf16.gmra.mxu0 %v448
        %v459 = vpop.f32.mrf.mxu0
        %v460 = vadd.f32 0.0, %v459
        %v461 = vpop.f32.mrf.mxu0
        %v462 = vadd.f32 0.0, %v461
        %463 = vdwg.mxu0
        %v466 = vunpack.c.l.b16 %v417
        %v467 = vunpack.c.l.b16 %v418
        %v468 = vpack.c.b16 %v467, %v466
        %v473 = vunpack.c.l.b16 %v419
        %v474 = vunpack.c.l.b16 %v420
        %v475 = vunpack.c.l.b16 %v421
        %v476 = vunpack.c.l.b16 %v422
        %v477 = vpack.c.b16 %v474, %v473
        %v478 = vpack.c.b16 %v476, %v475
        %v482 = vsel %vm446, %v468, 0
        %484 = vmatpush.bf16.msra.mxu0 0
        %485 = vmatpush.bf16.msra.mxu0 0
        %486 = vmatpush.bf16.msra.mxu0 0
        %487 = vmatpush.bf16.msra.mxu0 0
        %488 = vmatpush.bf16.msra.mxu0 0
        %489 = vmatpush.bf16.msra.mxu0 0
        %490 = vmatpush.bf16.msra.mxu0 %v478
        %491 = vmatpush.bf16.msra.mxu0 %v477
        %492 = vmatmul.bf16.gmra.mxu0 %v482
        %v493 = vpop.f32.mrf.mxu0
        %v494 = vadd.f32 %v460, %v493
        %v495 = vpop.f32.mrf.mxu0
        %v496 = vadd.f32 %v462, %v495
        %497 = vdwg.mxu0
        %v498 = vld [vmem:[%s397] sm:$0x1]
        %v500 = vperm.slane %v498, 0
        %v502 = vadd.f32 %v494, %v500
        %v503 = vadd.f32 %v496, %v500
        %v504 = vld [vmem:[%s402] sm:$0xff]
        %v505 = vld [vmem:[%s402 + $0x8] sm:$0xff]
        %s506 = smul.u32 %s31, 128
        %v507 = vstv %s506
        %v508 = vsub.s32 %v504, %v507
        %v509 = vsub.s32 %v505, %v507
        %v510 = vlaneseq
        %v511 = vand.u32 %v510, 127
        %512 = vset.pattern.permute.xlu0 0
        %513 = vperm.xlu0 %512, %v508
        %v514 = vpop.permute.xlu0 %513
        %515 = vset.pattern.permute.xlu0 0
        %516 = vperm.xlu0 %515, %v509
        %v517 = vpop.permute.xlu0 %516
        %vm518 = vcmp.eq.s32.totalorder %v511, %v514
        %vm519 = vcmp.eq.s32.totalorder %v511, %v517
        %v520 = vld [vmem:[#allocation4] sm:$0xff]
        %v521 = vld [vmem:[#allocation4 + $0x8] sm:$0xff]
        %v522 = vsel %vm518, %v502, 0.0
        %v523 = vsel %vm519, %v503, 0.0
        %524 = vadd.xlane.f32.xlu0 %v522
        %v525 = vpop.xlane.xlu0 %524
        %526 = vadd.xlane.f32.xlu0 %v523
        %v527 = vpop.xlane.xlu0 %526
        %v528 = vadd.f32 %v520, %v525
        %v529 = vadd.f32 %v521, %v527
        %vm530 = vcmask 7168
        %531 = vst.msk [vmem:[#allocation4] sm:$0xff] %vm530, %v528
        %532 = vst.msk [vmem:[#allocation4 + $0x8] sm:$0xff] %vm530, %v529
        %v533 = vld [vmem:[#allocation2] sm:$0xff]
        %v534 = vld [vmem:[#allocation2 + $0x8] sm:$0xff]
        %535 = vmax.xlane.f32.xlu0 %v502
        %v536 = vpop.xlane.xlu0 %535
        %537 = vmax.xlane.f32.xlu0 %v503
        %v538 = vpop.xlane.xlu0 %537
        %v539 = vmax.f32 %v533, %v536
        %v540 = vmax.f32 %v534, %v538
        %v541 = vld [vmem:[#allocation3] sm:$0xff]
        %v542 = vld [vmem:[#allocation3 + $0x8] sm:$0xff]
        %v543 = vsub.f32 %v533, %v539
        %v544 = vsub.f32 %v534, %v540
        %v545 = vmul.f32 %v543, 1.442695
        %v546 = vpow.pop %v545
        %v547 = vmul.f32 %v544, 1.442695
        %v548 = vpow.pop %v547
        %v549 = vmul.f32 %v541, %v546
        %v550 = vmul.f32 %v542, %v548
        %552 = vset.pattern.permute.xlu0 0
        %553 = vperm.xlu0 %552, %v539
        %v554 = vpop.permute.xlu0 %553
        %557 = vset.pattern.permute.xlu0 0
        %558 = vperm.xlu0 %557, %v540
        %v559 = vpop.permute.xlu0 %558
        %v561 = vsub.f32 %v502, %v554
        %v562 = vsub.f32 %v503, %v559
        %v563 = vmul.f32 %v561, 1.442695
        %v564 = vpow.pop %v563
        %v565 = vmul.f32 %v562, 1.442695
        %v566 = vpow.pop %v565
        %567 = vadd.xlane.f32.xlu0 %v564
        %v568 = vpop.xlane.xlu0 %567
        %569 = vadd.xlane.f32.xlu0 %v566
        %v570 = vpop.xlane.xlu0 %569
        %v571 = vadd.f32 %v549, %v568
        %v572 = vadd.f32 %v550, %v570
        %573 = vst.msk [vmem:[#allocation3] sm:$0xff] %vm530, %v571
        %574 = vst.msk [vmem:[#allocation3 + $0x8] sm:$0xff] %vm530, %v572
        %575 = vst.msk [vmem:[#allocation2] sm:$0xff] %vm530, %v539
        %576 = vst.msk [vmem:[#allocation2 + $0x8] sm:$0xff] %vm530, %v540
        %p577 = scmp.eq.s32.totalorder %s31, 3
        // Predicated region
        $region57: #{tpu_custom_call.1} parent=43 // pred_check
          %p578 = pneg %p577
        $region58: #{tpu_custom_call.1} parent=43 // pred_check_branch
          %580 = sbr.rel (%p578) target = $region60
        $region59: #{tpu_custom_call.1} parent=43 // pred_region
          %v581 = vld [vmem:[#allocation4] sm:$0xff]
          %v582 = vld [vmem:[#allocation4 + $0x8] sm:$0xff]
          %v583 = vld [vmem:[#allocation2] sm:$0xff]
          %v584 = vld [vmem:[#allocation2 + $0x8] sm:$0xff]
          %v585 = vld [vmem:[#allocation3] sm:$0xff]
          %v586 = vld [vmem:[#allocation3 + $0x8] sm:$0xff]
          %v587 = vlog2.pop %v585
          %v588 = vmul.f32 %v587, 0.6931472
          %v589 = vlog2.pop %v586
          %v590 = vmul.f32 %v589, 0.6931472
          %v591 = vadd.f32 %v583, %v588
          %v592 = vadd.f32 %v584, %v590
          %v593 = vsub.f32 %v581, %v591
          %v594 = vsub.f32 %v582, %v592
          %596 = vset.pattern.permute.xlu0 0
          %597 = vperm.xlu0 %596, %v593
          %v598 = vpop.permute.xlu0 %597
          %601 = vset.pattern.permute.xlu0 0
          %602 = vperm.xlu0 %601, %v594
          %v603 = vpop.permute.xlu0 %602
          %605 = vst [vmem:[%s382] sm:$0xff] %v598
          %606 = vst [vmem:[%s382 + $0x8] sm:$0xff] %v603
        $region60: #{tpu_custom_call.1} parent=43 // pred_fallthru
          _
        %s607 = sand.u32 %s202, 1
        %s608 = scalar_lea.sflag [#allocation7], %s607
        %s609 = sand.u32 %s202, 1
        %s610 = smul.addr %s609, 16
        %s611 = scalar_lea.vmem [#allocation10], %s610
        // Predicated region
        $region61: #{tpu_custom_call.1} parent=43 // pred_check
          %p612 = pneg %p212
        $region62: #{tpu_custom_call.1} parent=43 // pred_check_branch
          %614 = sbr.rel (%p612) target = $region64
        $region63: #{tpu_custom_call.1} parent=43 // pred_region
          %s615 = smul.u32 2, %s30
          %617 = vsyncadd %s608, 0
          %s618 = smul.addr %s615, 8
          %s619 = scalar_lea.hbm %s6, %s618
          %s620 = sshll.u32 %s611, 4
          %s621 = int_to_ptr.vmem [resolvable:$true] %s620
          %s622 = sshll.u32 %s619, 4
          %s623 = int_to_ptr.hbm [resolvable:$true] %s622
          %628 = dma.vmem_to_hbm [thread:$0]  %s621, 256, %s623, %s608, 128, 128, 8
        $region64: #{tpu_custom_call.1} parent=43 // pred_fallthru
          _
      $region44: #{tpu_custom_call.1} parent=5 // pred_fallthru
        _
      %p629 = scmp.le.s32.totalorder 2, %s21
      // Predicated region
      $region65: #{tpu_custom_call.1} parent=5 // pred_check
        %p630 = pneg %p629
      $region66: #{tpu_custom_call.1} parent=5 // pred_check_branch
        %632 = sbr.rel (%p630) target = $region68
      $region67: #{tpu_custom_call.1} parent=5 // pred_region
        %s633 = ssub.s32 %s21, 2
        // Predicated region
        $region69: #{tpu_custom_call.1} parent=67 // pred_check
          %p634 = pneg %p218
        $region70: #{tpu_custom_call.1} parent=67 // pred_check_branch
          %636 = sbr.rel (%p634) target = $region72
        $region71: #{tpu_custom_call.1} parent=67 // pred_region
          %s637 = sand.u32 %s203, 1
          %s638 = scalar_lea.sflag [#allocation7], %s637
          %s639 = sand.u32 %s203, 1
          %s640 = smul.addr %s639, 16
          %s641 = scalar_lea.vmem [#allocation10], %s640
          %643 = dma.done %s638, 256
        $region72: #{tpu_custom_call.1} parent=67 // pred_fallthru
          _
      $region68: #{tpu_custom_call.1} parent=5 // pred_fallthru
        _
    $region6: #{tpu_custom_call.1} parent=1 // loop_footer
      %s25 = sadd.s32 1, %s21
    $region7: #{tpu_custom_call.1} parent=1 // loop_footer_branch
      %20 = sbr.rel target = $region3
    $region8: #{tpu_custom_call.1} parent=1 // loop_exit
      _
    %644 = vsyncpa [#allocation6], 1
    %s645 = scalar_lea.sflag [#allocation6], 1
    %646 = vsyncpa %s645, 1
    %647 = vsyncpa [#allocation9], 1
    %s648 = scalar_lea.sflag [#allocation9], 1
    %649 = vsyncpa %s648, 1
    %650 = vsyncpa [#allocation7], 1
    %s651 = scalar_lea.sflag [#allocation7], 1
    %652 = vsyncpa %s651, 1

</llo_original>
